<compile_context>
chip_gen: v7x
topology: tpu7x:2x2x1
jax: 0.10.0
libtpu: 0.0.40
codegen_flags: <defaults>
</compile_context>

<pallas_src>
import jax
import jax.numpy as jnp
from jax.experimental import pallas as pl
from jax.experimental.pallas import tpu as pltpu

VOCAB = 128    # synthetic vocab size, padded to 128 lanes for a lane-dense one-hot
D = 128        # hidden size (lane-dense)
MAXLEN = 8     # wrapped.max_length (includes BOS/EOS)
B = 2          # batch size
BOS_ID = VOCAB - 2
EOS_ID = VOCAB - 1


# ----------------------------------------------------------------------------
# Fused kernel:
#   1) token embedding: in-kernel one-hot (iota compare) x table on the MXU
#      + positional embedding (broadcast over batch)
#   2) stand-in for wrapped CLIP transformer last_hidden_state: dense + tanh
#      TODO(synk): the real wrapped model is a full HF CLIP text transformer
#                  (12 attention blocks); it is external to this module and is
#                  stood in here by one dense layer producing last_hidden_state.
#   3) FrozenCLIPEmbedderWithCustomWords emphasis re-weighting:
#        original_mean = z.mean(); z *= int(mult); z *= original_mean / z.mean()
#      (implemented as a ratio of sums — identical value, fewer scalar ops)
# ----------------------------------------------------------------------------
def fused_clip_emphasis_kernel(tok_ref, mult_ref, table_ref, pos_ref,
                               w_ref, b_ref, out_ref):
    BT = tok_ref.shape[0]
    V = table_ref.shape[0]
    T = pos_ref.shape[0]

    # --- token embedding via lane-dense one-hot MXU matmul ---
    ids = tok_ref[...]                                            # (BT, 1) int32
    vocab_iota = jax.lax.broadcasted_iota(jnp.int32, (BT, V), 1)  # (BT, V)
    onehot = (ids == vocab_iota).astype(jnp.float32)              # (BT, V) lane-dense
    emb = jnp.dot(onehot, table_ref[...],
                  preferred_element_type=jnp.float32)             # (BT, D)

    # --- positional embedding, broadcast over the batch in-kernel ---
    pos = jnp.tile(pos_ref[...], (BT // T, 1))                    # (BT, D)
    x = emb + pos

    # --- stand-in transformer last_hidden_state ---
    h = jnp.dot(x, w_ref[...], preferred_element_type=jnp.float32) + b_ref[...]
    z = jnp.tanh(h)                                               # (BT, D)  (EUP)

    # --- emphasis re-weighting (global mean over the whole batch block,
    #     matching the original module's z.mean()).
    #     mean(z)/mean(z*m) == sum(z)/sum(z*m): use sums, skip the /(BT*D). ---
    m = mult_ref[...]                                             # (BT, 1) f32 (pre-truncated)
    zw = z * m
    s_orig = jnp.sum(z, axis=(0, 1), keepdims=True)               # (1, 1)
    s_new = jnp.sum(zw, axis=(0, 1), keepdims=True)               # (1, 1)
    # NOTE: like the original torch code, no guard against new_mean == 0.
    inv_new = pl.reciprocal(s_new, approx=True)                   # EUP slot, ~free
    out_ref[...] = zw * (s_orig * inv_new)


def _full_spec(shape):
    # single grid step, whole array as one VMEM block
    return pl.BlockSpec(shape, lambda i: tuple(0 for _ in shape))


def frozen_clip_embedder_forward(params, tokens, batch_multipliers):
    """tokens: (B, T) int32 ; batch_multipliers: (B, T) float32 -> z: (B, T, D) f32"""
    B_, T_ = tokens.shape
    BT = B_ * T_

    tok_col = tokens.reshape(BT, 1).astype(jnp.int32)
    # matches `batch_multipliers = torch.Tensor(batch_multipliers).int()` in the
    # original module (intentional truncation of 1.1 -> 1, 2.2 -> 2, ...).
    # Truncate AND pre-cast back to f32 here so the kernel does no VPU convert.
    mult_col = batch_multipliers.astype(jnp.int32).astype(jnp.float32).reshape(BT, 1)

    z_flat = pl.pallas_call(
        fused_clip_emphasis_kernel,
        out_shape=jax.ShapeDtypeStruct((BT, D), jnp.float32),
        grid=(1,),
        in_specs=[
            _full_spec((BT, 1)),        # token ids
            _full_spec((BT, 1)),        # truncated emphasis multipliers (f32)
            _full_spec((VOCAB, D)),     # token embedding table
            _full_spec((T_, D)),        # positional embedding (broadcast in-kernel)
            _full_spec((D, D)),         # stand-in dense weight
            _full_spec((1, D)),         # stand-in dense bias
        ],
        out_specs=_full_spec((BT, D)),
        compiler_params=pltpu.CompilerParams(
            dimension_semantics=("arbitrary",)),
    )(tok_col, mult_col, params["token_emb"], params["pos_emb"],
      params["w"], params["b"])

    return z_flat.reshape(B_, T_, D)


def reference_forward(params, tokens, batch_multipliers):
    """pure-JAX reference of the same forward semantics (exact divide)."""
    B_, T_ = tokens.shape
    emb = params["token_emb"][tokens.reshape(-1)] + jnp.tile(params["pos_emb"], (B_, 1))
    z = jnp.tanh(emb @ params["w"] + params["b"])
    m = batch_multipliers.astype(jnp.int32).astype(jnp.float32).reshape(-1, 1)
    original_mean = z.mean()
    zw = z * m
    new_mean = zw.mean()
    return (zw * (original_mean / new_mean)).reshape(B_, T_, D)


if __name__ == "__main__":
    key = jax.random.PRNGKey(0)
    k_tab, k_pos, k_w, k_b, k_ids, k_mult = jax.random.split(key, 6)

    # deterministic synthetic parameters (shapes implied by a CLIP text model)
    params = {
        "token_emb": 0.02 * jax.random.normal(k_tab, (VOCAB, D), jnp.float32),
        "pos_emb":   0.02 * jax.random.normal(k_pos, (MAXLEN, D), jnp.float32),
        "w":         0.05 * jax.random.normal(k_w, (D, D), jnp.float32),
        "b":         0.01 * jax.random.normal(k_b, (1, D), jnp.float32),
    }

    # tokens: [BOS, t1..t6, EOS] per batch row (what tokenize_line/process_text emits)
    mid = jax.random.randint(k_ids, (B, MAXLEN - 2), 0, VOCAB - 2, dtype=jnp.int32)
    tokens = jnp.concatenate(
        [jnp.full((B, 1), BOS_ID, jnp.int32), mid, jnp.full((B, 1), EOS_ID, jnp.int32)],
        axis=1,
    )

    # emphasis multipliers: 1.0 on BOS/EOS, assorted (a)/((a)) weights elsewhere
    choices = jnp.array([1.0, 1.1, 1.21, 2.2], jnp.float32)
    mid_mult = choices[jax.random.randint(k_mult, (B, MAXLEN - 2), 0, 4)]
    batch_multipliers = jnp.concatenate(
        [jnp.ones((B, 1), jnp.float32), mid_mult, jnp.ones((B, 1), jnp.float32)], axis=1
    )

    z = frozen_clip_embedder_forward(params, tokens, batch_multipliers)
    z = jax.block_until_ready(z)

    z_ref = reference_forward(params, tokens, batch_multipliers)
    assert z.shape == (B, MAXLEN, D)
    # tolerance loosened to 1e-3 because the kernel uses the EUP approximate
    # reciprocal for the mean ratio (reference uses an exact divide).
    assert jnp.allclose(z, z_ref, rtol=1e-3, atol=1e-3), "mismatch vs reference"

    print("KERNEL_OK")
</pallas_src>

<mosaic_0001>
module attributes {stable_mosaic.version = 11 : i64} {
  func.func @fused_clip_emphasis_kernel(%arg0: i32, %arg1: memref<16x1xi32, #tpu.memory_space<vmem>>, %arg2: memref<16x1xf32, #tpu.memory_space<vmem>>, %arg3: memref<128x128xf32, #tpu.memory_space<vmem>>, %arg4: memref<8x128xf32, #tpu.memory_space<vmem>>, %arg5: memref<128x128xf32, #tpu.memory_space<vmem>>, %arg6: memref<1x128xf32, #tpu.memory_space<vmem>>, %arg7: memref<16x128xf32, #tpu.memory_space<vmem>>) attributes {dimension_semantics = [#tpu.dimension_semantics<arbitrary>], iteration_bounds = array<i64: 1>, scalar_prefetch = 0 : i64, scratch_operands = 0 : i64, tpu.core_type = #tpu.core_type<tc>, window_params = [{pipeline_mode = #tpu.pipeline_mode<synchronous>, transform_indices = @transform_0, window_bounds = array<i64: 16, 1>}, {pipeline_mode = #tpu.pipeline_mode<synchronous>, transform_indices = @transform_1, window_bounds = array<i64: 16, 1>}, {pipeline_mode = #tpu.pipeline_mode<synchronous>, transform_indices = @transform_2, window_bounds = array<i64: 128, 128>}, {pipeline_mode = #tpu.pipeline_mode<synchronous>, transform_indices = @transform_3, window_bounds = array<i64: 8, 128>}, {pipeline_mode = #tpu.pipeline_mode<synchronous>, transform_indices = @transform_4, window_bounds = array<i64: 128, 128>}, {pipeline_mode = #tpu.pipeline_mode<synchronous>, transform_indices = @transform_5, window_bounds = array<i64: 1, 128>}, {pipeline_mode = #tpu.pipeline_mode<synchronous>, transform_indices = @transform_6, window_bounds = array<i64: 16, 128>}]} {
    %c0 = arith.constant 0 : index
    %c0_0 = arith.constant 0 : index
    %0 = vector.load %arg1[%c0, %c0_0] : memref<16x1xi32, #tpu.memory_space<vmem>>, vector<16x1xi32>
    %1 = tpu.iota {dimensions = array<i32: 1>} : vector<16x128xi32>
    %2 = vector.broadcast %0 : vector<16x1xi32> to vector<16x128xi32>
    %3 = arith.cmpi eq, %2, %1 : vector<16x128xi32>
    %4 = arith.extui %3 : vector<16x128xi1> to vector<16x128xi32>
    %5 = arith.sitofp %4 : vector<16x128xi32> to vector<16x128xf32>
    %c0_1 = arith.constant 0 : index
    %c0_2 = arith.constant 0 : index
    %6 = vector.load %arg3[%c0_1, %c0_2] : memref<128x128xf32, #tpu.memory_space<vmem>>, vector<128x128xf32>
    %cst = arith.constant dense<0.000000e+00> : vector<16x128xf32>
    %7 = tpu.matmul %5, %6, %cst {dimension_numbers = #tpu.dot_dimension_numbers<[1], [0], [0], [1], [0, 0, 1, 1], [], []>} : vector<16x128xf32>, vector<128x128xf32>, vector<16x128xf32> -> vector<16x128xf32>
    %c0_3 = arith.constant 0 : index
    %c0_4 = arith.constant 0 : index
    %8 = vector.load %arg4[%c0_3, %c0_4] : memref<8x128xf32, #tpu.memory_space<vmem>>, vector<8x128xf32>
    %9 = tpu.concatenate %8, %8 in 0 : vector<8x128xf32>, vector<8x128xf32> -> vector<16x128xf32>
    %10 = arith.addf %7, %9 : vector<16x128xf32>
    %c0_5 = arith.constant 0 : index
    %c0_6 = arith.constant 0 : index
    %11 = vector.load %arg5[%c0_5, %c0_6] : memref<128x128xf32, #tpu.memory_space<vmem>>, vector<128x128xf32>
    %cst_7 = arith.constant dense<0.000000e+00> : vector<16x128xf32>
    %12 = tpu.matmul %10, %11, %cst_7 {dimension_numbers = #tpu.dot_dimension_numbers<[1], [0], [0], [1], [0, 0, 1, 1], [], []>} : vector<16x128xf32>, vector<128x128xf32>, vector<16x128xf32> -> vector<16x128xf32>
    %c0_8 = arith.constant 0 : index
    %c0_9 = arith.constant 0 : index
    %13 = vector.load %arg6[%c0_8, %c0_9] : memref<1x128xf32, #tpu.memory_space<vmem>>, vector<1x128xf32>
    %14 = vector.broadcast %13 : vector<1x128xf32> to vector<16x128xf32>
    %15 = arith.addf %12, %14 : vector<16x128xf32>
    %16 = math.tanh %15 : vector<16x128xf32>
    %c0_10 = arith.constant 0 : index
    %c0_11 = arith.constant 0 : index
    %17 = vector.load %arg2[%c0_10, %c0_11] : memref<16x1xf32, #tpu.memory_space<vmem>>, vector<16x1xf32>
    %18 = vector.broadcast %17 : vector<16x1xf32> to vector<16x128xf32>
    %19 = arith.mulf %16, %18 : vector<16x128xf32>
    %20 = vector.shape_cast %16 : vector<16x128xf32> to vector<1x16x128xf32>
    %cst_12 = arith.constant dense<0.000000e+00> : vector<1xf32>
    %21 = vector.multi_reduction <add>, %20, %cst_12 [1, 2] : vector<1x16x128xf32> to vector<1xf32>
    %22 = vector.shape_cast %21 : vector<1xf32> to vector<1x1x1xf32>
    %23 = vector.extract %22[0, 0, 0] : f32 from vector<1x1x1xf32>
    %24 = vector.broadcast %23 : f32 to vector<1x1xf32>
    %25 = vector.shape_cast %19 : vector<16x128xf32> to vector<1x16x128xf32>
    %cst_13 = arith.constant dense<0.000000e+00> : vector<1xf32>
    %26 = vector.multi_reduction <add>, %25, %cst_13 [1, 2] : vector<1x16x128xf32> to vector<1xf32>
    %27 = vector.shape_cast %26 : vector<1xf32> to vector<1x1x1xf32>
    %28 = vector.extract %27[0, 0, 0] : f32 from vector<1x1x1xf32>
    %29 = vector.broadcast %28 : f32 to vector<1x1xf32>
    %30 = tpu.reciprocal %29 {approx = true} : vector<1x1xf32> -> vector<1x1xf32>
    %31 = arith.mulf %24, %30 : vector<1x1xf32>
    %32 = vector.broadcast %31 : vector<1x1xf32> to vector<16x128xf32>
    %33 = arith.mulf %19, %32 : vector<16x128xf32>
    %c0_14 = arith.constant 0 : index
    %c0_15 = arith.constant 0 : index
    %34 = vector.load %arg7[%c0_14, %c0_15] : memref<16x128xf32, #tpu.memory_space<vmem>>, vector<16x128xf32>
    tpu.vector_store %arg7[%c0_14, %c0_15], %33 {strides = array<i32>} : memref<16x128xf32, #tpu.memory_space<vmem>>, vector<16x128xf32>,
    return
  }
  func.func @transform_0(%arg0: i32) -> (i32, i32) {
    %c0_i32 = arith.constant 0 : i32
    %c0_i32_0 = arith.constant 0 : i32
    %c0_i32_1 = arith.constant 0 : i32
    return %c0_i32, %c0_i32_0 : i32, i32
  }
  func.func @transform_1(%arg0: i32) -> (i32, i32) {
    %c0_i32 = arith.constant 0 : i32
    %c0_i32_0 = arith.constant 0 : i32
    %c0_i32_1 = arith.constant 0 : i32
    return %c0_i32, %c0_i32_0 : i32, i32
  }
  func.func @transform_2(%arg0: i32) -> (i32, i32) {
    %c0_i32 = arith.constant 0 : i32
    %c0_i32_0 = arith.constant 0 : i32
    %c0_i32_1 = arith.constant 0 : i32
    return %c0_i32, %c0_i32_0 : i32, i32
  }
  func.func @transform_3(%arg0: i32) -> (i32, i32) {
    %c0_i32 = arith.constant 0 : i32
    %c0_i32_0 = arith.constant 0 : i32
    %c0_i32_1 = arith.constant 0 : i32
    return %c0_i32, %c0_i32_0 : i32, i32
  }
  func.func @transform_4(%arg0: i32) -> (i32, i32) {
    %c0_i32 = arith.constant 0 : i32
    %c0_i32_0 = arith.constant 0 : i32
    %c0_i32_1 = arith.constant 0 : i32
    return %c0_i32, %c0_i32_0 : i32, i32
  }
  func.func @transform_5(%arg0: i32) -> (i32, i32) {
    %c0_i32 = arith.constant 0 : i32
    %c0_i32_0 = arith.constant 0 : i32
    %c0_i32_1 = arith.constant 0 : i32
    return %c0_i32, %c0_i32_0 : i32, i32
  }
  func.func @transform_6(%arg0: i32) -> (i32, i32) {
    %c0_i32 = arith.constant 0 : i32
    %c0_i32_0 = arith.constant 0 : i32
    %c0_i32_1 = arith.constant 0 : i32
    return %c0_i32, %c0_i32_0 : i32, i32
  }
}

</mosaic_0001>

<llo_original>
// kernel: tpu_custom_call.1
$region0: #{tpu_custom_call.1}
  #allocation0 [shape = 'u32[]', space=smem, size = 0x4, offset = 0x4, fixed_abs, tag = 'smem constant byte address 0x4 - core index']
  #allocation1 [shape = 'u32[144,128]{1,0:T(1,128)}', space=vmem, size = 0x12000, scoped, tag = 'internal scratch']
  %s0 = inlined_call_operand.vmem [shape: s32[16,1], index: 0, kind: input, shape index: {}]
  %s1 = inlined_call_operand.vmem [shape: f32[16,1], index: 1, kind: input, shape index: {}]
  %s2 = inlined_call_operand.hbm [shape: f32[128,128], index: 2, kind: input, shape index: {}]
  %s3 = inlined_call_operand.vmem [shape: f32[8,128], index: 3, kind: input, shape index: {}]
  %s4 = inlined_call_operand.hbm [shape: f32[128,128], index: 4, kind: input, shape index: {}]
  %s5 = inlined_call_operand.vmem [shape: f32[1,128], index: 5, kind: input, shape index: {}]
  %s6 = inlined_call_operand.hbm [shape: f32[16,128], index: 6, kind: output, shape index: {}]
  %s7 = sld [smem:[#allocation0]]
  $region42: #{tpu_custom_call.1} parent=0
    _
  %s9 = ssub.s32 1, %s7
  %s10 = scalar_select 0, %s9, %s7
  $region1: #{tpu_custom_call.1} parent=0
    #allocation2 [shape = 'u8[65536]{0}', space=vmem, size = 0x10000, scoped, tag = 'input window, operand 2, single buffered']
    #allocation3 [shape = 's32[1]{0}', space=sflag, size = 0x4, scoped, tag = 'scoped memory for tpu_custom_call.1']
    #allocation4 [shape = 's32[1]{0}', space=sflag, size = 0x4, scoped, tag = 'scoped memory for tpu_custom_call.1']
    #allocation5 [shape = 'u8[65536]{0}', space=vmem, size = 0x10000, scoped, tag = 'input window, operand 4, single buffered']
    #allocation6 [shape = 's32[1]{0}', space=sflag, size = 0x4, scoped, tag = 'scoped memory for tpu_custom_call.1']
    #allocation7 [shape = 'u8[8192]{0}', space=vmem, size = 0x2000, scoped, tag = 'output window, operand 0, single buffered']
    %11 = vsyncpa [#allocation3], 0
    %12 = vsyncpa [#allocation6], 0
    %13 = vsyncpa [#allocation4], 0
    // Predicated region
    $region2: #{tpu_custom_call.1} parent=1 // pred_check
      _
    $region3: #{tpu_custom_call.1} parent=1 // pred_check_branch
      %15 = sbr.rel (0) target = $region5
    $region4: #{tpu_custom_call.1} parent=1 // pred_region
      _
    $region5: #{tpu_custom_call.1} parent=1 // pred_fallthru
      _
    // Predicated region
    $region6: #{tpu_custom_call.1} parent=1 // pred_check
      _
    $region7: #{tpu_custom_call.1} parent=1 // pred_check_branch
      %17 = sbr.rel (0) target = $region9
    $region8: #{tpu_custom_call.1} parent=1 // pred_region
      _
    $region9: #{tpu_custom_call.1} parent=1 // pred_fallthru
      _
    // Predicated region
    $region10: #{tpu_custom_call.1} parent=1 // pred_check
      _
    $region11: #{tpu_custom_call.1} parent=1 // pred_check_branch
      %19 = sbr.rel (0) target = $region13
    $region12: #{tpu_custom_call.1} parent=1 // pred_region
      %s21 = ssub.s32 2048, 2048
      %22 = vsyncadd [#allocation3], %s21
      %s23 = sshll.u32 [#allocation2], 4
      %s24 = int_to_ptr.vmem [resolvable:$true] %s23
      %29 = dma.hbm_to_vmem [thread:$0]  %s2, 2048, %s24, [#allocation3], 128, 128, 8
    $region13: #{tpu_custom_call.1} parent=1 // pred_fallthru
      _
    // Predicated region
    $region14: #{tpu_custom_call.1} parent=1 // pred_check
      _
    $region15: #{tpu_custom_call.1} parent=1 // pred_check_branch
      %31 = sbr.rel (0) target = $region17
    $region16: #{tpu_custom_call.1} parent=1 // pred_region
      _
    $region17: #{tpu_custom_call.1} parent=1 // pred_fallthru
      _
    // Predicated region
    $region18: #{tpu_custom_call.1} parent=1 // pred_check
      _
    $region19: #{tpu_custom_call.1} parent=1 // pred_check_branch
      %33 = sbr.rel (0) target = $region21
    $region20: #{tpu_custom_call.1} parent=1 // pred_region
      %s35 = ssub.s32 2048, 2048
      %36 = vsyncadd [#allocation6], %s35
      %s37 = sshll.u32 [#allocation5], 4
      %s38 = int_to_ptr.vmem [resolvable:$true] %s37
      %43 = dma.hbm_to_vmem [thread:$0]  %s4, 2048, %s38, [#allocation6], 128, 128, 8
    $region21: #{tpu_custom_call.1} parent=1 // pred_fallthru
      _
    // Predicated region
    $region22: #{tpu_custom_call.1} parent=1 // pred_check
      _
    $region23: #{tpu_custom_call.1} parent=1 // pred_check_branch
      %45 = sbr.rel (0) target = $region25
    $region24: #{tpu_custom_call.1} parent=1 // pred_region
      _
    $region25: #{tpu_custom_call.1} parent=1 // pred_fallthru
      _
    // Predicated region
    $region26: #{tpu_custom_call.1} parent=1 // pred_check
      _
    $region27: #{tpu_custom_call.1} parent=1 // pred_check_branch
      %47 = sbr.rel (0) target = $region29
    $region28: #{tpu_custom_call.1} parent=1 // pred_region
      %48 = dma.done [#allocation3], 2048
    $region29: #{tpu_custom_call.1} parent=1 // pred_fallthru
      _
    // Predicated region
    $region30: #{tpu_custom_call.1} parent=1 // pred_check
      _
    $region31: #{tpu_custom_call.1} parent=1 // pred_check_branch
      %50 = sbr.rel (0) target = $region33
    $region32: #{tpu_custom_call.1} parent=1 // pred_region
      %51 = dma.done [#allocation6], 2048
    $region33: #{tpu_custom_call.1} parent=1 // pred_fallthru
      _
    %v52 = vld [vmem:[%s0] sm:$0xff]
    %v53 = vld [vmem:[%s0 + $0x8] sm:$0xff]
    %v54 = vlaneseq
    %v55 = vand.u32 %v54, 127
    %56 = vset.pattern.permute.xlu0 0
    %57 = vperm.xlu0 %56, %v52
    %v58 = vpop.permute.xlu0 %57
    %59 = vset.pattern.permute.xlu0 0
    %60 = vperm.xlu0 %59, %v53
    %v61 = vpop.permute.xlu0 %60
    %vm62 = vcmp.eq.s32.totalorder %v58, %v55
    %vm63 = vcmp.eq.s32.totalorder %v61, %v55
    %v64 = vsel %vm62, 1, 0
    %v65 = vsel %vm63, 1, 0
    %v66 = vcvt.s32.f32 %v64
    %v67 = vcvt.s32.f32 %v65
    %v68 = vld [vmem:[#allocation2] sm:$0xff]
    %v69 = vld [vmem:[#allocation2 + $0x8] sm:$0xff]
    %v70 = vld [vmem:[#allocation2 + $0x10] sm:$0xff]
    %v71 = vld [vmem:[#allocation2 + $0x18] sm:$0xff]
    %v72 = vld [vmem:[#allocation2 + $0x20] sm:$0xff]
    %v73 = vld [vmem:[#allocation2 + $0x28] sm:$0xff]
    %v74 = vld [vmem:[#allocation2 + $0x30] sm:$0xff]
    %v75 = vld [vmem:[#allocation2 + $0x38] sm:$0xff]
    %v76 = vld [vmem:[#allocation2 + $0x40] sm:$0xff]
    %v77 = vld [vmem:[#allocation2 + $0x48] sm:$0xff]
    %v78 = vld [vmem:[#allocation2 + $0x50] sm:$0xff]
    %v79 = vld [vmem:[#allocation2 + $0x58] sm:$0xff]
    %v80 = vld [vmem:[#allocation2 + $0x60] sm:$0xff]
    %v81 = vld [vmem:[#allocation2 + $0x68] sm:$0xff]
    %v82 = vld [vmem:[#allocation2 + $0x70] sm:$0xff]
    %v83 = vld [vmem:[#allocation2 + $0x78] sm:$0xff]
    %v84 = vld [vmem:[%s3] sm:$0xff]
    %85 = vmatprep.subr.mxu0 0.0
    %86 = vmatpush1.msra.mxu0 %v68
    %87 = vmatprep.subr.mxu0 0.0
    %88 = vmatpush1.msra.mxu0 %v69
    %89 = vmatprep.subr.mxu0 0.0
    %90 = vmatpush1.msra.mxu0 %v70
    %91 = vmatprep.subr.mxu0 0.0
    %92 = vmatpush1.msra.mxu0 %v71
    %93 = vmatprep.subr.mxu0 0.0
    %94 = vmatpush1.msra.mxu0 %v72
    %95 = vmatprep.subr.mxu0 0.0
    %96 = vmatpush1.msra.mxu0 %v73
    %97 = vmatprep.subr.mxu0 0.0
    %98 = vmatpush1.msra.mxu0 %v74
    %99 = vmatprep.subr.mxu0 0.0
    %100 = vmatpush1.msra.mxu0 %v75
    %101 = vmatprep.subr.mxu0 0.0
    %102 = vmatpush1.msra.mxu0 %v76
    %103 = vmatprep.subr.mxu0 0.0
    %104 = vmatpush1.msra.mxu0 %v77
    %105 = vmatprep.subr.mxu0 0.0
    %106 = vmatpush1.msra.mxu0 %v78
    %107 = vmatprep.subr.mxu0 0.0
    %108 = vmatpush1.msra.mxu0 %v79
    %109 = vmatprep.subr.mxu0 0.0
    %110 = vmatpush1.msra.mxu0 %v80
    %111 = vmatprep.subr.mxu0 0.0
    %112 = vmatpush1.msra.mxu0 %v81
    %113 = vmatprep.subr.mxu0 0.0
    %114 = vmatpush1.msra.mxu0 %v82
    %115 = vmatprep.subr.mxu0 0.0
    %116 = vmatpush1.msra.mxu0 %v83
    %117 = vmatprep.subr.mxu0 0.0
    %118 = vmatpush1.msra.mxu0 0.0
    %119 = vmatprep.subr.mxu0 0.0
    %120 = vmatpush1.msra.mxu0 0.0
    %121 = vmatprep.subr.mxu0 0.0
    %122 = vmatpush1.msra.mxu0 0.0
    %123 = vmatprep.subr.mxu0 0.0
    %124 = vmatpush1.msra.mxu0 0.0
    %125 = vmatprep.subr.mxu0 0.0
    %126 = vmatpush1.msra.mxu0 0.0
    %127 = vmatprep.subr.mxu0 0.0
    %128 = vmatpush1.msra.mxu0 0.0
    %129 = vmatprep.subr.mxu0 0.0
    %130 = vmatpush1.msra.mxu0 0.0
    %131 = vmatprep.subr.mxu0 0.0
    %132 = vmatpush1.msra.mxu0 0.0
    %133 = vmatprep.subr.mxu0 0.0
    %134 = vmatpush1.msra.mxu0 0.0
    %135 = vmatprep.subr.mxu0 0.0
    %136 = vmatpush1.msra.mxu0 0.0
    %137 = vmatprep.subr.mxu0 0.0
    %138 = vmatpush1.msra.mxu0 0.0
    %139 = vmatprep.subr.mxu0 0.0
    %140 = vmatpush1.msra.mxu0 0.0
    %141 = vmatprep.subr.mxu0 0.0
    %142 = vmatpush1.msra.mxu0 0.0
    %143 = vmatprep.subr.mxu0 0.0
    %144 = vmatpush1.msra.mxu0 0.0
    %145 = vmatprep.subr.mxu0 0.0
    %146 = vmatpush1.msra.mxu0 0.0
    %147 = vmatprep.subr.mxu0 0.0
    %148 = vmatpush1.msra.mxu0 0.0
    %149 = vmatprep.mubr.f32.mxu0 0.0
    %150 = vmatmul.mubr.f32.gmra.mrb[0].mxu0 %v66
    %v151 = vpop.f32.mrb[0].mxu0
    %v152 = vadd.f32 %v84, %v151
    %v153 = vpop.f32.mrb[0].mxu0
    %154 = vmatprep.mubr.f32.mxu0 0.0
    %155 = vmatmul.mubr.f32.gmra.mrb[0].mxu0 %v67
    %v156 = vpop.f32.mrb[0].mxu0
    %v157 = vadd.f32 %v84, %v156
    %v158 = vpop.f32.mrb[0].mxu0
    %159 = vdwg.mxu0
    %v160 = vld [vmem:[#allocation5] sm:$0xff]
    %v161 = vld [vmem:[#allocation5 + $0x8] sm:$0xff]
    %v162 = vld [vmem:[#allocation5 + $0x10] sm:$0xff]
    %v163 = vld [vmem:[#allocation5 + $0x18] sm:$0xff]
    %v164 = vld [vmem:[#allocation5 + $0x20] sm:$0xff]
    %v165 = vld [vmem:[#allocation5 + $0x28] sm:$0xff]
    %v166 = vld [vmem:[#allocation5 + $0x30] sm:$0xff]
    %v167 = vld [vmem:[#allocation5 + $0x38] sm:$0xff]
    %v168 = vld [vmem:[#allocation5 + $0x40] sm:$0xff]
    %v169 = vld [vmem:[#allocation5 + $0x48] sm:$0xff]
    %v170 = vld [vmem:[#allocation5 + $0x50] sm:$0xff]
    %v171 = vld [vmem:[#allocation5 + $0x58] sm:$0xff]
    %v172 = vld [vmem:[#allocation5 + $0x60] sm:$0xff]
    %v173 = vld [vmem:[#allocation5 + $0x68] sm:$0xff]
    %v174 = vld [vmem:[#allocation5 + $0x70] sm:$0xff]
    %v175 = vld [vmem:[#allocation5 + $0x78] sm:$0xff]
    %v176 = vld [vmem:[%s5] sm:$0x1]
    %v178 = vlaneseq
    %v179 = vshrl.u32 %v178, 7
    %v180 = vsub.s32 0, %v179
    %v181 = vrot.slane %v176, %v180
    %183 = vmatprep.subr.mxu0 0.0
    %184 = vmatpush1.msra.mxu0 %v160
    %185 = vmatprep.subr.mxu0 0.0
    %186 = vmatpush1.msra.mxu0 %v161
    %187 = vmatprep.subr.mxu0 0.0
    %188 = vmatpush1.msra.mxu0 %v162
    %189 = vmatprep.subr.mxu0 0.0
    %190 = vmatpush1.msra.mxu0 %v163
    %191 = vmatprep.subr.mxu0 0.0
    %192 = vmatpush1.msra.mxu0 %v164
    %193 = vmatprep.subr.mxu0 0.0
    %194 = vmatpush1.msra.mxu0 %v165
    %195 = vmatprep.subr.mxu0 0.0
    %196 = vmatpush1.msra.mxu0 %v166
    %197 = vmatprep.subr.mxu0 0.0
    %198 = vmatpush1.msra.mxu0 %v167
    %199 = vmatprep.subr.mxu0 0.0
    %200 = vmatpush1.msra.mxu0 %v168
    %201 = vmatprep.subr.mxu0 0.0
    %202 = vmatpush1.msra.mxu0 %v169
    %203 = vmatprep.subr.mxu0 0.0
    %204 = vmatpush1.msra.mxu0 %v170
    %205 = vmatprep.subr.mxu0 0.0
    %206 = vmatpush1.msra.mxu0 %v171
    %207 = vmatprep.subr.mxu0 0.0
    %208 = vmatpush1.msra.mxu0 %v172
    %209 = vmatprep.subr.mxu0 0.0
    %210 = vmatpush1.msra.mxu0 %v173
    %211 = vmatprep.subr.mxu0 0.0
    %212 = vmatpush1.msra.mxu0 %v174
    %213 = vmatprep.subr.mxu0 0.0
    %214 = vmatpush1.msra.mxu0 %v175
    %215 = vmatprep.subr.mxu0 0.0
    %216 = vmatpush1.msra.mxu0 0.0
    %217 = vmatprep.subr.mxu0 0.0
    %218 = vmatpush1.msra.mxu0 0.0
    %219 = vmatprep.subr.mxu0 0.0
    %220 = vmatpush1.msra.mxu0 0.0
    %221 = vmatprep.subr.mxu0 0.0
    %222 = vmatpush1.msra.mxu0 0.0
    %223 = vmatprep.subr.mxu0 0.0
    %224 = vmatpush1.msra.mxu0 0.0
    %225 = vmatprep.subr.mxu0 0.0
    %226 = vmatpush1.msra.mxu0 0.0
    %227 = vmatprep.subr.mxu0 0.0
    %228 = vmatpush1.msra.mxu0 0.0
    %229 = vmatprep.subr.mxu0 0.0
    %230 = vmatpush1.msra.mxu0 0.0
    %231 = vmatprep.subr.mxu0 0.0
    %232 = vmatpush1.msra.mxu0 0.0
    %233 = vmatprep.subr.mxu0 0.0
    %234 = vmatpush1.msra.mxu0 0.0
    %235 = vmatprep.subr.mxu0 0.0
    %236 = vmatpush1.msra.mxu0 0.0
    %237 = vmatprep.subr.mxu0 0.0
    %238 = vmatpush1.msra.mxu0 0.0
    %239 = vmatprep.subr.mxu0 0.0
    %240 = vmatpush1.msra.mxu0 0.0
    %241 = vmatprep.subr.mxu0 0.0
    %242 = vmatpush1.msra.mxu0 0.0
    %243 = vmatprep.subr.mxu0 0.0
    %244 = vmatpush1.msra.mxu0 0.0
    %245 = vmatprep.subr.mxu0 0.0
    %246 = vmatpush1.msra.mxu0 0.0
    %247 = vmatprep.mubr.f32.mxu0 0.0
    %248 = vmatmul.mubr.f32.gmra.mrb[0].mxu0 %v152
    %v249 = vpop.f32.mrb[0].mxu0
    %v250 = vadd.f32 %v181, %v249
    %v251 = vpop.f32.mrb[0].mxu0
    %252 = vmatprep.mubr.f32.mxu0 0.0
    %253 = vmatmul.mubr.f32.gmra.mrb[0].mxu0 %v157
    %v254 = vpop.f32.mrb[0].mxu0
    %v255 = vadd.f32 %v181, %v254
    %v256 = vpop.f32.mrb[0].mxu0
    %257 = vdwg.mxu0
    %v258 = vtanh.pop %v250
    %v259 = vtanh.pop %v255
    %v260 = vld [vmem:[%s1] sm:$0xff]
    %v261 = vld [vmem:[%s1 + $0x8] sm:$0xff]
    %263 = vset.pattern.permute.xlu0 0
    %264 = vperm.xlu0 %263, %v260
    %v265 = vpop.permute.xlu0 %264
    %268 = vset.pattern.permute.xlu0 0
    %269 = vperm.xlu0 %268, %v261
    %v270 = vpop.permute.xlu0 %269
    %v272 = vmul.f32 %v258, %v265
    %v273 = vmul.f32 %v259, %v270
    %v274 = vadd.f32 %v258, %v259
    %275 = vadd.xlane.f32.xlu0 %v274
    %v276 = vpop.xlane.xlu0 %275
    %v277 = vrot.slane %v276, 4
    %v278 = vadd.f32 %v276, %v277
    %v279 = vrot.slane %v278, 2
    %v280 = vadd.f32 %v278, %v279
    %v281 = vrot.slane %v280, 1
    %v282 = vadd.f32 %v280, %v281
    %s283 = vtos %v282
    %v284 = vstv %s283
    %v285 = vadd.f32 %v272, %v273
    %286 = vadd.xlane.f32.xlu0 %v285
    %v287 = vpop.xlane.xlu0 %286
    %v288 = vrot.slane %v287, 4
    %v289 = vadd.f32 %v287, %v288
    %v290 = vrot.slane %v289, 2
    %v291 = vadd.f32 %v289, %v290
    %v292 = vrot.slane %v291, 1
    %v293 = vadd.f32 %v291, %v292
    %s294 = vtos %v293
    %v295 = vstv %s294
    %v296 = vrcp.pop %v295
    %v297 = vmul.f32 %v284, %v296
    %v298 = vmul.f32 %v272, %v297
    %v299 = vmul.f32 %v273, %v297
    %300 = vst [vmem:[#allocation7] sm:$0xff] %v298
    %301 = vst [vmem:[#allocation7 + $0x8] sm:$0xff] %v299
    // Predicated region
    $region34: #{tpu_custom_call.1} parent=1 // pred_check
      _
    $region35: #{tpu_custom_call.1} parent=1 // pred_check_branch
      %303 = sbr.rel (0) target = $region37
    $region36: #{tpu_custom_call.1} parent=1 // pred_region
      %s305 = ssub.s32 256, 256
      %306 = vsyncadd [#allocation4], %s305
      %s307 = sshll.u32 [#allocation7], 4
      %s308 = int_to_ptr.vmem [resolvable:$true] %s307
      %313 = dma.vmem_to_hbm [thread:$0]  %s308, 256, %s6, [#allocation4], 128, 128, 8
    $region37: #{tpu_custom_call.1} parent=1 // pred_fallthru
      _
    // Predicated region
    $region38: #{tpu_custom_call.1} parent=1 // pred_check
      _
    $region39: #{tpu_custom_call.1} parent=1 // pred_check_branch
      %315 = sbr.rel (0) target = $region41
    $region40: #{tpu_custom_call.1} parent=1 // pred_region
      %316 = dma.done [#allocation4], 256
    $region41: #{tpu_custom_call.1} parent=1 // pred_fallthru
      _
    %317 = vsyncpa [#allocation3], 1
    %318 = vsyncpa [#allocation6], 1
    %319 = vsyncpa [#allocation4], 1

</llo_original>
